<compile_context>
chip_gen: v7x
topology: tpu7x:2x2x1
jax: 0.10.0
libtpu: 0.0.40
codegen_flags: <defaults>
</compile_context>

<pallas_src>
import jax
import jax.numpy as jnp
from jax.experimental import pallas as pl
from jax.experimental.pallas import tpu as pltpu


def _round_up(n, m):
    return ((n + m - 1) // m) * m


def _device_kind():
    try:
        return jax.devices()[0].device_kind.lower()
    except Exception:
        return ""


def _hidden_align():
    """MXU-friendly hidden alignment: 256 on v6e/v7x (2x256 MXU), 128 on v5e."""
    return 128 if "v5" in _device_kind() else 256


def _vmem_budget_bytes():
    """Usable VMEM budget per generation (headroom under physical capacity)."""
    kind = _device_kind()
    if "v7" in kind:
        return 48 << 20       # v7x: 64 MiB physical per TensorCore
    if "v5" in kind or "v6" in kind:
        return 100 << 20      # v5e / v6e: 128 MiB physical
    return 48 << 20           # unknown chip: stay conservative


def _vmem_need_bytes(tb, feat_pad, hp):
    """Rough per-kernel VMEM footprint (double-buffered inputs + temporaries)."""
    x_bufs = 2 * tb * feat_pad * 2                       # bf16 activation tile x2
    w_bufs = 2 * (feat_pad * hp * 2                      # W1 (bf16) x2
                  + hp * hp * 2                          # W2 (bf16) x2
                  + hp * 2                               # w3 (bf16) x2
                  + 2 * hp * 4)                          # b1, b2 (f32) x2
    out_bufs = 2 * tb * 4                                # (1, tb) f32 output x2
    temps = 2 * tb * hp * 4 + tb * hp * 2                # h1/h2 f32 + bf16(h1)
    return x_bufs + w_bufs + out_bufs + temps + (4 << 20)   # + slack


def _select_tb(b_pad, feat_pad, hp, budget, max_tb):
    """Largest batch tile that divides b_pad and fits the VMEM budget."""
    for tb in (2048, 1024, 512, 256, 128):
        if tb > max_tb or tb > b_pad or b_pad % tb != 0:
            continue
        if _vmem_need_bytes(tb, feat_pad, hp) <= budget:
            return tb
    return 128


def _qnet_kernel(x_ref, w1_ref, b1_ref, w2_ref, b2_ref, w3_ref, b3_ref, out_ref):
    """One batch tile: [TB, F] (bf16) -> [1, TB] lane-dense f32 q values."""
    # fc1 -- bf16 MXU matmul, f32 accumulation, f32 bias + ReLU.
    h1 = jnp.dot(x_ref[...], w1_ref[...], preferred_element_type=jnp.float32)
    h1 = jnp.maximum(h1 + b1_ref[...], 0.0)                         # [TB, Hp] f32
    # fc2 -- cast activation back to bf16 for the MXU; accumulate in f32.
    h2 = jnp.dot(h1.astype(jnp.bfloat16), w2_ref[...],
                 preferred_element_type=jnp.float32)
    h2 = jnp.maximum(h2 + b2_ref[...], 0.0)                         # [TB, Hp] f32
    # fc3 (out_features == 1): VPU multiply + lane reduction instead of an
    # N=1 MXU matmul; write lane-dense so the store is an unmasked full vst.
    q = jnp.sum(h2 * w3_ref[...].astype(jnp.float32), axis=-1)      # [TB]
    out_ref[...] = (q + b3_ref[0, 0])[None, :]                      # [1, TB]


def q_net_forward(obs, act, packed_params, *, max_block_b=2048):
    """obs: [B, obs_dim], act: [B, act_dim] -> q: [B] (float32)."""
    w1, b1, w2, b2, w3, b3 = packed_params
    feat_pad, hp = w1.shape              # fc1 input padded to 8, hidden to 128/256
    B = obs.shape[0]
    feat = obs.shape[1] + act.shape[1]

    # Single contiguous activation stream: concat + feature pad + bf16 cast.
    x = jnp.concatenate([obs.astype(jnp.float32), act.astype(jnp.float32)],
                        axis=1)
    x = jnp.pad(x, ((0, 0), (0, feat_pad - feat))).astype(jnp.bfloat16)

    # Pad the batch only to a multiple of 128 (caps tail waste at <128 rows).
    b_pad = _round_up(max(B, 1), 128)
    if b_pad != B:
        x = jnp.pad(x, ((0, b_pad - B), (0, 0)))

    budget = _vmem_budget_bytes()
    tb = _select_tb(b_pad, feat_pad, hp, budget, max_block_b)
    vmem_limit = int(min(budget,
                         max(_vmem_need_bytes(tb, feat_pad, hp), 32 << 20)))

    const = lambda i: (0, 0)             # weights/biases stay VMEM-resident

    flops = 2 * b_pad * (feat_pad * hp + hp * hp + hp)
    bytes_accessed = (b_pad * feat_pad * 2                    # x (bf16)
                      + (feat_pad * hp + hp * hp + hp) * 2    # weights (bf16)
                      + 2 * hp * 4 + 4                        # biases (f32)
                      + b_pad * 4)                            # output (f32)

    out = pl.pallas_call(
        _qnet_kernel,
        out_shape=jax.ShapeDtypeStruct((1, b_pad), jnp.float32),
        grid_spec=pltpu.PrefetchScalarGridSpec(
            num_scalar_prefetch=0,
            grid=(b_pad // tb,),
            in_specs=[
                pl.BlockSpec((tb, feat_pad), lambda i: (i, 0)),      # x tile (bf16)
                pl.BlockSpec((feat_pad, hp), const),                 # W1 (bf16)
                pl.BlockSpec((1, hp), const),                        # b1 (f32)
                pl.BlockSpec((hp, hp), const),                       # W2 (bf16)
                pl.BlockSpec((1, hp), const),                        # b2 (f32)
                pl.BlockSpec((1, hp), const),                        # w3 row (bf16)
                pl.BlockSpec(memory_space=pltpu.MemorySpace.SMEM),   # b3 scalar
            ],
            out_specs=pl.BlockSpec((1, tb), lambda i: (0, i)),       # lane-dense
        ),
        compiler_params=pltpu.CompilerParams(
            dimension_semantics=("parallel",),    # batch axis -> megacore shard
            vmem_limit_bytes=vmem_limit),
        cost_estimate=pl.CostEstimate(
            flops=flops, transcendentals=0, bytes_accessed=bytes_accessed),
    )(x, w1, b1, w2, b2, w3, b3)

    return out[0, :B]


def init_params(key, obs_dim, act_dim, layer_size):
    """nn.Linear-style init, weights stored transposed [in_features, out_features]."""
    def linear(k, fan_in, fan_out):
        kw, kb = jax.random.split(k)
        bound = 1.0 / jnp.sqrt(jnp.float32(fan_in))
        w = jax.random.uniform(kw, (fan_in, fan_out), jnp.float32, -bound, bound)
        b = jax.random.uniform(kb, (1, fan_out), jnp.float32, -bound, bound)
        return w, b

    k1, k2, k3 = jax.random.split(key, 3)
    w1, b1 = linear(k1, obs_dim + act_dim, layer_size)
    w2, b2 = linear(k2, layer_size, layer_size)
    w3, b3 = linear(k3, layer_size, 1)
    return (w1, b1, w2, b2, w3, b3)


def pack_params(params):
    """Pad to MXU-friendly shapes and cast matmul weights to bf16.

    * hidden dim -> multiple of 256 (v6e/v7x) or 128 (v5e).  Zero padding is
      exact: padded hidden units get zero weight + zero bias, stay zero through
      ReLU and contribute nothing via zeroed W2 rows / w3 columns.
    * fc1 input dim -> multiple of 8 (sublane) so the concatenated obs|act
      stream is aligned (padded input columns have zero weight).
    * W1/W2/w3 -> bf16 for the MXU/VPU; biases stay f32 (accumulation, bias
      adds and the final reduce run in f32 inside the kernel).
    Do this once (outside the training step) so the kernel sees aligned shapes.
    """
    w1, b1, w2, b2, w3, b3 = params
    feat, h = w1.shape
    hp = _round_up(h, _hidden_align())
    feat_pad = _round_up(feat, 8)
    pad_h = hp - h
    w1p = jnp.pad(w1, ((0, feat_pad - feat), (0, pad_h))).astype(jnp.bfloat16)
    b1p = jnp.pad(b1, ((0, 0), (0, pad_h)))                          # f32 [1, Hp]
    w2p = jnp.pad(w2, ((0, pad_h), (0, pad_h))).astype(jnp.bfloat16)  # [Hp, Hp]
    b2p = jnp.pad(b2, ((0, 0), (0, pad_h)))                          # f32 [1, Hp]
    w3p = jnp.pad(w3.T, ((0, 0), (0, pad_h))).astype(jnp.bfloat16)   # [1, Hp]
    return (w1p, b1p, w2p, b2p, w3p, b3)                             # b3: [1,1] f32


if __name__ == "__main__":
    batch = 2
    obs_dim = 4
    act_dim = 2
    layer_size = 32

    key = jax.random.PRNGKey(0)
    k_obs, k_act, k_params = jax.random.split(key, 3)

    obs = jax.random.normal(k_obs, (batch, obs_dim), jnp.float32)
    act = jax.random.normal(k_act, (batch, act_dim), jnp.float32)

    params = init_params(k_params, obs_dim, act_dim, layer_size)
    packed = pack_params(params)

    q = jax.jit(q_net_forward)(obs, act, packed)
    jax.block_until_ready(q)

    # Pure-JAX f32 reference (unpadded, f32 params) — same math as the module.
    w1, b1, w2, b2, w3, b3 = params
    x = jnp.concatenate([obs, act], axis=1)
    ref = jnp.maximum(x @ w1 + b1, 0.0)
    ref = jnp.maximum(ref @ w2 + b2, 0.0)
    ref = jnp.squeeze(ref @ w3 + b3, -1)

    assert q.shape == (batch,)
    # bf16 MXU inputs: tolerance relaxed from 1e-5 to ~1e-2.
    assert jnp.allclose(q, ref, atol=5e-2, rtol=5e-2), (q, ref)

    print("KERNEL_OK")
</pallas_src>

<mosaic_0001>
module attributes {stable_mosaic.version = 11 : i64} {
  func.func @_qnet_kernel(%arg0: i32, %arg1: memref<128x8xbf16, #tpu.memory_space<vmem>>, %arg2: memref<8x256xbf16, #tpu.memory_space<vmem>>, %arg3: memref<1x256xf32, #tpu.memory_space<vmem>>, %arg4: memref<256x256xbf16, #tpu.memory_space<vmem>>, %arg5: memref<1x256xf32, #tpu.memory_space<vmem>>, %arg6: memref<1x256xbf16, #tpu.memory_space<vmem>>, %arg7: memref<1x1xf32, #tpu.memory_space<smem>>, %arg8: memref<1x128xf32, #tpu.memory_space<vmem>>) attributes {dimension_semantics = [#tpu.dimension_semantics<parallel>], iteration_bounds = array<i64: 1>, scalar_prefetch = 0 : i64, scratch_operands = 0 : i64, tpu.core_type = #tpu.core_type<tc>, window_params = [{transform_indices = @transform_0, window_bounds = array<i64: 128, 8>}, {pipeline_mode = #tpu.pipeline_mode<synchronous>, transform_indices = @transform_1, window_bounds = array<i64: 8, 256>}, {pipeline_mode = #tpu.pipeline_mode<synchronous>, transform_indices = @transform_2, window_bounds = array<i64: 1, 256>}, {pipeline_mode = #tpu.pipeline_mode<synchronous>, transform_indices = @transform_3, window_bounds = array<i64: 256, 256>}, {pipeline_mode = #tpu.pipeline_mode<synchronous>, transform_indices = @transform_4, window_bounds = array<i64: 1, 256>}, {pipeline_mode = #tpu.pipeline_mode<synchronous>, transform_indices = @transform_5, window_bounds = array<i64: 1, 256>}, {transform_indices = @transform_6, window_bounds = array<i64: 1, 1>}, {transform_indices = @transform_7, window_bounds = array<i64: 1, 128>}]} {
    %c0 = arith.constant 0 : index
    %c0_0 = arith.constant 0 : index
    %0 = vector.load %arg1[%c0, %c0_0] : memref<128x8xbf16, #tpu.memory_space<vmem>>, vector<128x8xbf16>
    %c0_1 = arith.constant 0 : index
    %c0_2 = arith.constant 0 : index
    %1 = vector.load %arg2[%c0_1, %c0_2] : memref<8x256xbf16, #tpu.memory_space<vmem>>, vector<8x256xbf16>
    %cst = arith.constant dense<0.000000e+00> : vector<128x256xf32>
    %2 = tpu.matmul %0, %1, %cst {dimension_numbers = #tpu.dot_dimension_numbers<[1], [0], [0], [1], [0, 0, 1, 1], [], []>} : vector<128x8xbf16>, vector<8x256xbf16>, vector<128x256xf32> -> vector<128x256xf32>
    %c0_3 = arith.constant 0 : index
    %c0_4 = arith.constant 0 : index
    %3 = vector.load %arg3[%c0_3, %c0_4] : memref<1x256xf32, #tpu.memory_space<vmem>>, vector<1x256xf32>
    %4 = vector.broadcast %3 : vector<1x256xf32> to vector<128x256xf32>
    %5 = arith.addf %2, %4 : vector<128x256xf32>
    %cst_5 = arith.constant 0.000000e+00 : f32
    %6 = vector.broadcast %cst_5 : f32 to vector<128x256xf32>
    %7 = arith.maximumf %5, %6 : vector<128x256xf32>
    %8 = arith.truncf %7 : vector<128x256xf32> to vector<128x256xbf16>
    %c0_6 = arith.constant 0 : index
    %c0_7 = arith.constant 0 : index
    %9 = vector.load %arg4[%c0_6, %c0_7] : memref<256x256xbf16, #tpu.memory_space<vmem>>, vector<256x256xbf16>
    %cst_8 = arith.constant dense<0.000000e+00> : vector<128x256xf32>
    %10 = tpu.matmul %8, %9, %cst_8 {dimension_numbers = #tpu.dot_dimension_numbers<[1], [0], [0], [1], [0, 0, 1, 1], [], []>} : vector<128x256xbf16>, vector<256x256xbf16>, vector<128x256xf32> -> vector<128x256xf32>
    %c0_9 = arith.constant 0 : index
    %c0_10 = arith.constant 0 : index
    %11 = vector.load %arg5[%c0_9, %c0_10] : memref<1x256xf32, #tpu.memory_space<vmem>>, vector<1x256xf32>
    %12 = vector.broadcast %11 : vector<1x256xf32> to vector<128x256xf32>
    %13 = arith.addf %10, %12 : vector<128x256xf32>
    %cst_11 = arith.constant 0.000000e+00 : f32
    %14 = vector.broadcast %cst_11 : f32 to vector<128x256xf32>
    %15 = arith.maximumf %13, %14 : vector<128x256xf32>
    %c0_12 = arith.constant 0 : index
    %c0_13 = arith.constant 0 : index
    %16 = vector.load %arg6[%c0_12, %c0_13] : memref<1x256xbf16, #tpu.memory_space<vmem>>, vector<1x256xbf16>
    %17 = arith.extf %16 : vector<1x256xbf16> to vector<1x256xf32>
    %18 = vector.broadcast %17 : vector<1x256xf32> to vector<128x256xf32>
    %19 = arith.mulf %15, %18 : vector<128x256xf32>
    %cst_14 = arith.constant dense<0.000000e+00> : vector<128xf32>
    %20 = vector.multi_reduction <add>, %19, %cst_14 [1] : vector<128x256xf32> to vector<128xf32>
    %c0_15 = arith.constant 0 : index
    %c0_16 = arith.constant 0 : index
    %21 = memref.load %arg7[%c0_15, %c0_16] : memref<1x1xf32, #tpu.memory_space<smem>>
    %22 = vector.broadcast %21 : f32 to vector<128xf32>
    %23 = arith.addf %20, %22 : vector<128xf32>
    %24 = vector.shape_cast %23 : vector<128xf32> to vector<1x128xf32>
    %c0_17 = arith.constant 0 : index
    %c0_18 = arith.constant 0 : index
    %25 = vector.load %arg8[%c0_17, %c0_18] : memref<1x128xf32, #tpu.memory_space<vmem>>, vector<1x128xf32>
    tpu.vector_store %arg8[%c0_17, %c0_18], %24 {strides = array<i32>} : memref<1x128xf32, #tpu.memory_space<vmem>>, vector<1x128xf32>,
    return
  }
  func.func @transform_0(%arg0: i32) -> (i32, i32) {
    %c0_i32 = arith.constant 0 : i32
    %c0_i32_0 = arith.constant 0 : i32
    return %arg0, %c0_i32 : i32, i32
  }
  func.func @transform_1(%arg0: i32) -> (i32, i32) {
    %c0_i32 = arith.constant 0 : i32
    %c0_i32_0 = arith.constant 0 : i32
    %c0_i32_1 = arith.constant 0 : i32
    return %c0_i32, %c0_i32_0 : i32, i32
  }
  func.func @transform_2(%arg0: i32) -> (i32, i32) {
    %c0_i32 = arith.constant 0 : i32
    %c0_i32_0 = arith.constant 0 : i32
    %c0_i32_1 = arith.constant 0 : i32
    return %c0_i32, %c0_i32_0 : i32, i32
  }
  func.func @transform_3(%arg0: i32) -> (i32, i32) {
    %c0_i32 = arith.constant 0 : i32
    %c0_i32_0 = arith.constant 0 : i32
    %c0_i32_1 = arith.constant 0 : i32
    return %c0_i32, %c0_i32_0 : i32, i32
  }
  func.func @transform_4(%arg0: i32) -> (i32, i32) {
    %c0_i32 = arith.constant 0 : i32
    %c0_i32_0 = arith.constant 0 : i32
    %c0_i32_1 = arith.constant 0 : i32
    return %c0_i32, %c0_i32_0 : i32, i32
  }
  func.func @transform_5(%arg0: i32) -> (i32, i32) {
    %c0_i32 = arith.constant 0 : i32
    %c0_i32_0 = arith.constant 0 : i32
    %c0_i32_1 = arith.constant 0 : i32
    return %c0_i32, %c0_i32_0 : i32, i32
  }
  func.func @transform_6(%arg0: i32) -> (i32, i32) {
    %c0_i32 = arith.constant 0 : i32
    %c0_i32_0 = arith.constant 0 : i32
    %c0_i32_1 = arith.constant 0 : i32
    return %c0_i32, %c0_i32_0 : i32, i32
  }
  func.func @transform_7(%arg0: i32) -> (i32, i32) {
    %c0_i32 = arith.constant 0 : i32
    %c0_i32_0 = arith.constant 0 : i32
    return %c0_i32, %arg0 : i32, i32
  }
}

</mosaic_0001>

<llo_original>
// kernel: q_net_forward.1
$region0: #{q_net_forward.1}
  #allocation0 [shape = 'u32[]', space=smem, size = 0x4, offset = 0x4, fixed_abs, tag = 'smem constant byte address 0x4 - core index']
  #allocation1 [shape = 'u32[144,128]{1,0:T(1,128)}', space=vmem, size = 0x12000, scoped, tag = 'internal scratch']
  #allocation2 [shape = 'f32[1,1]{1,0:T(1,128)S(6)}', space=smem, size = 0x200, scoped, tag = 'scoped memory for q_net_forward.1']
  %s0 = inlined_call_operand.vmem [shape: bf16[128,8], index: 0, kind: input, shape index: {}]
  %s1 = inlined_call_operand.vmem [shape: bf16[8,256], index: 1, kind: input, shape index: {}]
  %s2 = inlined_call_operand.vmem [shape: f32[1,256], index: 2, kind: input, shape index: {}]
  %s3 = inlined_call_operand.hbm [shape: bf16[256,256], index: 3, kind: input, shape index: {}]
  %s4 = inlined_call_operand.vmem [shape: f32[1,256], index: 4, kind: input, shape index: {}]
  %s5 = inlined_call_operand.vmem [shape: bf16[1,256], index: 5, kind: input, shape index: {}]
  %s6 = inlined_call_operand.<no memory space> [shape: f32[1,1], index: 6, kind: input, shape index: {}]
  %s7 = inlined_call_operand.vmem [shape: f32[1,128], index: 7, kind: output, shape index: {}]
  %s8 = sld [smem:[#allocation0]]
  $region42: #{q_net_forward.1} parent=0
    _
  %s10 = ssub.s32 1, %s8
  %s11 = scalar_select 0, %s10, %s8
  %12 = sst [smem:[#allocation2]] %s6
  $region1: #{q_net_forward.1} parent=0
    #allocation3 [shape = 'u8[131072]{0}', space=vmem, size = 0x20000, scoped, tag = 'input window, operand 3, single buffered']
    #allocation4 [shape = 's32[1]{0}', space=sflag, size = 0x4, scoped, tag = 'scoped memory for q_net_forward.1']
    %13 = vsyncpa [#allocation4], 0
    // Predicated region
    $region2: #{q_net_forward.1} parent=1 // pred_check
      _
    $region3: #{q_net_forward.1} parent=1 // pred_check_branch
      %15 = sbr.rel (0) target = $region5
    $region4: #{q_net_forward.1} parent=1 // pred_region
      _
    $region5: #{q_net_forward.1} parent=1 // pred_fallthru
      _
    // Predicated region
    $region6: #{q_net_forward.1} parent=1 // pred_check
      _
    $region7: #{q_net_forward.1} parent=1 // pred_check_branch
      %17 = sbr.rel (0) target = $region9
    $region8: #{q_net_forward.1} parent=1 // pred_region
      _
    $region9: #{q_net_forward.1} parent=1 // pred_fallthru
      _
    // Predicated region
    $region10: #{q_net_forward.1} parent=1 // pred_check
      _
    $region11: #{q_net_forward.1} parent=1 // pred_check_branch
      %19 = sbr.rel (0) target = $region13
    $region12: #{q_net_forward.1} parent=1 // pred_region
      _
    $region13: #{q_net_forward.1} parent=1 // pred_fallthru
      _
    // Predicated region
    $region14: #{q_net_forward.1} parent=1 // pred_check
      _
    $region15: #{q_net_forward.1} parent=1 // pred_check_branch
      %21 = sbr.rel (0) target = $region17
    $region16: #{q_net_forward.1} parent=1 // pred_region
      %s23 = ssub.s32 4096, 4096
      %24 = vsyncadd [#allocation4], %s23
      %s25 = sshll.u32 [#allocation3], 4
      %s26 = int_to_ptr.vmem [resolvable:$true] %s25
      %31 = dma.hbm_to_vmem [thread:$0]  %s3, 4096, %s26, [#allocation4], 128, 128, 8
    $region17: #{q_net_forward.1} parent=1 // pred_fallthru
      _
    // Predicated region
    $region18: #{q_net_forward.1} parent=1 // pred_check
      _
    $region19: #{q_net_forward.1} parent=1 // pred_check_branch
      %33 = sbr.rel (0) target = $region21
    $region20: #{q_net_forward.1} parent=1 // pred_region
      _
    $region21: #{q_net_forward.1} parent=1 // pred_fallthru
      _
    // Predicated region
    $region22: #{q_net_forward.1} parent=1 // pred_check
      _
    $region23: #{q_net_forward.1} parent=1 // pred_check_branch
      %35 = sbr.rel (0) target = $region25
    $region24: #{q_net_forward.1} parent=1 // pred_region
      _
    $region25: #{q_net_forward.1} parent=1 // pred_fallthru
      _
    // Predicated region
    $region26: #{q_net_forward.1} parent=1 // pred_check
      _
    $region27: #{q_net_forward.1} parent=1 // pred_check_branch
      %37 = sbr.rel (0) target = $region29
    $region28: #{q_net_forward.1} parent=1 // pred_region
      _
    $region29: #{q_net_forward.1} parent=1 // pred_fallthru
      _
    // Predicated region
    $region30: #{q_net_forward.1} parent=1 // pred_check
      _
    $region31: #{q_net_forward.1} parent=1 // pred_check_branch
      %39 = sbr.rel (0) target = $region33
    $region32: #{q_net_forward.1} parent=1 // pred_region
      %40 = dma.done [#allocation4], 4096
    $region33: #{q_net_forward.1} parent=1 // pred_fallthru
      _
    %v42 = vld [vmem:[%s0] sm:$0xf]
    %v43 = vld [vmem:[%s0 + $0x4] sm:$0xf]
    %v44 = vld [vmem:[%s0 + $0x8] sm:$0xf]
    %v45 = vld [vmem:[%s0 + $0xc] sm:$0xf]
    %v46 = vld [vmem:[%s0 + $0x10] sm:$0xf]
    %v47 = vld [vmem:[%s0 + $0x14] sm:$0xf]
    %v48 = vld [vmem:[%s0 + $0x18] sm:$0xf]
    %v49 = vld [vmem:[%s0 + $0x1c] sm:$0xf]
    %v50 = vld [vmem:[%s0 + $0x20] sm:$0xf]
    %v51 = vld [vmem:[%s0 + $0x24] sm:$0xf]
    %v52 = vld [vmem:[%s0 + $0x28] sm:$0xf]
    %v53 = vld [vmem:[%s0 + $0x2c] sm:$0xf]
    %v54 = vld [vmem:[%s0 + $0x30] sm:$0xf]
    %v55 = vld [vmem:[%s0 + $0x34] sm:$0xf]
    %v56 = vld [vmem:[%s0 + $0x38] sm:$0xf]
    %v57 = vld [vmem:[%s0 + $0x3c] sm:$0xf]
    %v58 = vld [vmem:[%s1] sm:$0xff]
    %v59 = vld [vmem:[%s2] sm:$0x3]
    %v61 = vlaneseq
    %v62 = vshrl.u32 %v61, 7
    %v63 = vsub.s32 0, %v62
    %v64 = vrot.slane %v59, %v63
    %v65 = vlaneseq
    %v66 = vshrl.u32 %v65, 7
    %v67 = vsub.s32 1, %v66
    %v68 = vrot.slane %v59, %v67
    %v87 = vunpack.c.l.b16 %v42
    %v88 = vunpack.c.l.b16 %v43
    %v89 = vunpack.c.l.b16 %v44
    %v90 = vunpack.c.l.b16 %v45
    %v91 = vunpack.c.l.b16 %v46
    %v92 = vunpack.c.l.b16 %v47
    %v93 = vunpack.c.l.b16 %v48
    %v94 = vunpack.c.l.b16 %v49
    %v95 = vunpack.c.l.b16 %v50
    %v96 = vunpack.c.l.b16 %v51
    %v97 = vunpack.c.l.b16 %v52
    %v98 = vunpack.c.l.b16 %v53
    %v99 = vunpack.c.l.b16 %v54
    %v100 = vunpack.c.l.b16 %v55
    %v101 = vunpack.c.l.b16 %v56
    %v102 = vunpack.c.l.b16 %v57
    %v103 = vpack.c.b16 %v88, %v87
    %v104 = vpack.c.b16 %v90, %v89
    %v105 = vpack.c.b16 %v92, %v91
    %v106 = vpack.c.b16 %v94, %v93
    %v107 = vpack.c.b16 %v96, %v95
    %v108 = vpack.c.b16 %v98, %v97
    %v109 = vpack.c.b16 %v100, %v99
    %v110 = vpack.c.b16 %v102, %v101
    %v112 = vunpack.c.l.b16 %v58
    %v113 = vunpack.c.h.b16 %v58
    %v114 = vpack.c.b16 %v112, %v112
    %v115 = vpack.c.b16 %v113, %v113
    %vm116 = vcmask 64512
    %v118 = vsel %vm116, %v103, 0
    %v121 = vsel %vm116, %v104, 0
    %v124 = vsel %vm116, %v105, 0
    %v127 = vsel %vm116, %v106, 0
    %v130 = vsel %vm116, %v107, 0
    %v133 = vsel %vm116, %v108, 0
    %v136 = vsel %vm116, %v109, 0
    %v139 = vsel %vm116, %v110, 0
    %vm141 = vcmask 1043456
    %v143 = vsel %vm141, %v114, 0
    %v146 = vsel %vm141, %v115, 0
    %148 = vmatprep.subr.bf16.mxu0 %v146
    %149 = vmatpush1.bf16.msra.mxu0 %v143
    %150 = vmatprep.subr.bf16.mxu0 0
    %151 = vmatpush1.bf16.msra.mxu0 0
    %152 = vmatprep.subr.bf16.mxu0 0
    %153 = vmatpush1.bf16.msra.mxu0 0
    %154 = vmatprep.subr.bf16.mxu0 0
    %155 = vmatpush1.bf16.msra.mxu0 0
    %156 = vmatprep.subr.bf16.mxu0 0
    %157 = vmatpush1.bf16.msra.mxu0 0
    %158 = vmatprep.subr.bf16.mxu0 0
    %159 = vmatpush1.bf16.msra.mxu0 0
    %160 = vmatprep.subr.bf16.mxu0 0
    %161 = vmatpush1.bf16.msra.mxu0 0
    %162 = vmatprep.subr.bf16.mxu0 0
    %163 = vmatpush1.bf16.msra.mxu0 0
    %164 = vmatprep.subr.bf16.mxu0 0
    %165 = vmatpush1.bf16.msra.mxu0 0
    %166 = vmatprep.subr.bf16.mxu0 0
    %167 = vmatpush1.bf16.msra.mxu0 0
    %168 = vmatprep.subr.bf16.mxu0 0
    %169 = vmatpush1.bf16.msra.mxu0 0
    %170 = vmatprep.subr.bf16.mxu0 0
    %171 = vmatpush1.bf16.msra.mxu0 0
    %172 = vmatprep.subr.bf16.mxu0 0
    %173 = vmatpush1.bf16.msra.mxu0 0
    %174 = vmatprep.subr.bf16.mxu0 0
    %175 = vmatpush1.bf16.msra.mxu0 0
    %176 = vmatprep.subr.bf16.mxu0 0
    %177 = vmatpush1.bf16.msra.mxu0 0
    %178 = vmatprep.subr.bf16.mxu0 0
    %179 = vmatpush1.bf16.msra.mxu0 0
    %180 = vmatprep.mubr.bf16.mxu0 0
    %181 = vmatmul.mubr.bf16.gmra.mrb[0].mxu0 %v118
    %v182 = vpop.f32.mrb[0].mxu0
    %v183 = vadd.f32 %v64, %v182
    %v184 = vpop.f32.mrb[0].mxu0
    %v185 = vadd.f32 %v68, %v184
    %v186 = vpop.f32.mrb[0].mxu0
    %v187 = vadd.f32 %v64, %v186
    %v188 = vpop.f32.mrb[0].mxu0
    %v189 = vadd.f32 %v68, %v188
    %190 = vmatprep.mubr.bf16.mxu0 0
    %191 = vmatmul.mubr.bf16.gmra.mrb[0].mxu0 %v121
    %v192 = vpop.f32.mrb[0].mxu0
    %v193 = vadd.f32 %v64, %v192
    %v194 = vpop.f32.mrb[0].mxu0
    %v195 = vadd.f32 %v68, %v194
    %v196 = vpop.f32.mrb[0].mxu0
    %v197 = vadd.f32 %v64, %v196
    %v198 = vpop.f32.mrb[0].mxu0
    %v199 = vadd.f32 %v68, %v198
    %200 = vmatprep.mubr.bf16.mxu0 0
    %201 = vmatmul.mubr.bf16.gmra.mrb[0].mxu0 %v124
    %v202 = vpop.f32.mrb[0].mxu0
    %v203 = vadd.f32 %v64, %v202
    %v204 = vpop.f32.mrb[0].mxu0
    %v205 = vadd.f32 %v68, %v204
    %v206 = vpop.f32.mrb[0].mxu0
    %v207 = vadd.f32 %v64, %v206
    %v208 = vpop.f32.mrb[0].mxu0
    %v209 = vadd.f32 %v68, %v208
    %210 = vmatprep.mubr.bf16.mxu0 0
    %211 = vmatmul.mubr.bf16.gmra.mrb[0].mxu0 %v127
    %v212 = vpop.f32.mrb[0].mxu0
    %v213 = vadd.f32 %v64, %v212
    %v214 = vpop.f32.mrb[0].mxu0
    %v215 = vadd.f32 %v68, %v214
    %v216 = vpop.f32.mrb[0].mxu0
    %v217 = vadd.f32 %v64, %v216
    %v218 = vpop.f32.mrb[0].mxu0
    %v219 = vadd.f32 %v68, %v218
    %220 = vmatprep.mubr.bf16.mxu0 0
    %221 = vmatmul.mubr.bf16.gmra.mrb[0].mxu0 %v130
    %v222 = vpop.f32.mrb[0].mxu0
    %v223 = vadd.f32 %v64, %v222
    %v224 = vpop.f32.mrb[0].mxu0
    %v225 = vadd.f32 %v68, %v224
    %v226 = vpop.f32.mrb[0].mxu0
    %v227 = vadd.f32 %v64, %v226
    %v228 = vpop.f32.mrb[0].mxu0
    %v229 = vadd.f32 %v68, %v228
    %230 = vmatprep.mubr.bf16.mxu0 0
    %231 = vmatmul.mubr.bf16.gmra.mrb[0].mxu0 %v133
    %v232 = vpop.f32.mrb[0].mxu0
    %v233 = vadd.f32 %v64, %v232
    %v234 = vpop.f32.mrb[0].mxu0
    %v235 = vadd.f32 %v68, %v234
    %v236 = vpop.f32.mrb[0].mxu0
    %v237 = vadd.f32 %v64, %v236
    %v238 = vpop.f32.mrb[0].mxu0
    %v239 = vadd.f32 %v68, %v238
    %240 = vmatprep.mubr.bf16.mxu0 0
    %241 = vmatmul.mubr.bf16.gmra.mrb[0].mxu0 %v136
    %v242 = vpop.f32.mrb[0].mxu0
    %v243 = vadd.f32 %v64, %v242
    %v244 = vpop.f32.mrb[0].mxu0
    %v245 = vadd.f32 %v68, %v244
    %v246 = vpop.f32.mrb[0].mxu0
    %v247 = vadd.f32 %v64, %v246
    %v248 = vpop.f32.mrb[0].mxu0
    %v249 = vadd.f32 %v68, %v248
    %250 = vmatprep.mubr.bf16.mxu0 0
    %251 = vmatmul.mubr.bf16.gmra.mrb[0].mxu0 %v139
    %v252 = vpop.f32.mrb[0].mxu0
    %v253 = vadd.f32 %v64, %v252
    %v254 = vpop.f32.mrb[0].mxu0
    %v255 = vadd.f32 %v68, %v254
    %v256 = vpop.f32.mrb[0].mxu0
    %v257 = vadd.f32 %v64, %v256
    %v258 = vpop.f32.mrb[0].mxu0
    %v259 = vadd.f32 %v68, %v258
    %260 = vdwg.mxu0
    %v261 = vmax.f32 %v183, 0.0
    %v262 = vmax.f32 %v185, 0.0
    %v263 = vmax.f32 %v187, 0.0
    %v264 = vmax.f32 %v189, 0.0
    %v265 = vmax.f32 %v193, 0.0
    %v266 = vmax.f32 %v195, 0.0
    %v267 = vmax.f32 %v197, 0.0
    %v268 = vmax.f32 %v199, 0.0
    %v269 = vmax.f32 %v203, 0.0
    %v270 = vmax.f32 %v205, 0.0
    %v271 = vmax.f32 %v207, 0.0
    %v272 = vmax.f32 %v209, 0.0
    %v273 = vmax.f32 %v213, 0.0
    %v274 = vmax.f32 %v215, 0.0
    %v275 = vmax.f32 %v217, 0.0
    %v276 = vmax.f32 %v219, 0.0
    %v277 = vmax.f32 %v223, 0.0
    %v278 = vmax.f32 %v225, 0.0
    %v279 = vmax.f32 %v227, 0.0
    %v280 = vmax.f32 %v229, 0.0
    %v281 = vmax.f32 %v233, 0.0
    %v282 = vmax.f32 %v235, 0.0
    %v283 = vmax.f32 %v237, 0.0
    %v284 = vmax.f32 %v239, 0.0
    %v285 = vmax.f32 %v243, 0.0
    %v286 = vmax.f32 %v245, 0.0
    %v287 = vmax.f32 %v247, 0.0
    %v288 = vmax.f32 %v249, 0.0
    %v289 = vmax.f32 %v253, 0.0
    %v290 = vmax.f32 %v255, 0.0
    %v291 = vmax.f32 %v257, 0.0
    %v292 = vmax.f32 %v259, 0.0
    %v293 = vpack.c.bf16 %v263, %v261
    %v294 = vpack.c.bf16 %v264, %v262
    %v295 = vpack.c.bf16 %v267, %v265
    %v296 = vpack.c.bf16 %v268, %v266
    %v297 = vpack.c.bf16 %v271, %v269
    %v298 = vpack.c.bf16 %v272, %v270
    %v299 = vpack.c.bf16 %v275, %v273
    %v300 = vpack.c.bf16 %v276, %v274
    %v301 = vpack.c.bf16 %v279, %v277
    %v302 = vpack.c.bf16 %v280, %v278
    %v303 = vpack.c.bf16 %v283, %v281
    %v304 = vpack.c.bf16 %v284, %v282
    %v305 = vpack.c.bf16 %v287, %v285
    %v306 = vpack.c.bf16 %v288, %v286
    %v307 = vpack.c.bf16 %v291, %v289
    %v308 = vpack.c.bf16 %v292, %v290
    %v309 = vld [vmem:[#allocation3] sm:$0xff]
    %v310 = vld [vmem:[#allocation3 + $0x8] sm:$0xff]
    %v311 = vld [vmem:[#allocation3 + $0x10] sm:$0xff]
    %v312 = vld [vmem:[#allocation3 + $0x18] sm:$0xff]
    %v313 = vld [vmem:[#allocation3 + $0x20] sm:$0xff]
    %v314 = vld [vmem:[#allocation3 + $0x28] sm:$0xff]
    %v315 = vld [vmem:[#allocation3 + $0x30] sm:$0xff]
    %v316 = vld [vmem:[#allocation3 + $0x38] sm:$0xff]
    %v317 = vld [vmem:[#allocation3 + $0x40] sm:$0xff]
    %v318 = vld [vmem:[#allocation3 + $0x48] sm:$0xff]
    %v319 = vld [vmem:[#allocation3 + $0x50] sm:$0xff]
    %v320 = vld [vmem:[#allocation3 + $0x58] sm:$0xff]
    %v321 = vld [vmem:[#allocation3 + $0x60] sm:$0xff]
    %v322 = vld [vmem:[#allocation3 + $0x68] sm:$0xff]
    %v323 = vld [vmem:[#allocation3 + $0x70] sm:$0xff]
    %v324 = vld [vmem:[#allocation3 + $0x78] sm:$0xff]
    %v325 = vld [vmem:[#allocation3 + $0x80] sm:$0xff]
    %v326 = vld [vmem:[#allocation3 + $0x88] sm:$0xff]
    %v327 = vld [vmem:[#allocation3 + $0x90] sm:$0xff]
    %v328 = vld [vmem:[#allocation3 + $0x98] sm:$0xff]
    %v329 = vld [vmem:[#allocation3 + $0xa0] sm:$0xff]
    %v330 = vld [vmem:[#allocation3 + $0xa8] sm:$0xff]
    %v331 = vld [vmem:[#allocation3 + $0xb0] sm:$0xff]
    %v332 = vld [vmem:[#allocation3 + $0xb8] sm:$0xff]
    %v333 = vld [vmem:[#allocation3 + $0xc0] sm:$0xff]
    %v334 = vld [vmem:[#allocation3 + $0xc8] sm:$0xff]
    %v335 = vld [vmem:[#allocation3 + $0xd0] sm:$0xff]
    %v336 = vld [vmem:[#allocation3 + $0xd8] sm:$0xff]
    %v337 = vld [vmem:[#allocation3 + $0xe0] sm:$0xff]
    %v338 = vld [vmem:[#allocation3 + $0xe8] sm:$0xff]
    %v339 = vld [vmem:[#allocation3 + $0xf0] sm:$0xff]
    %v340 = vld [vmem:[#allocation3 + $0xf8] sm:$0xff]
    %v341 = vld [vmem:[%s4] sm:$0x3]
    %v343 = vlaneseq
    %v344 = vshrl.u32 %v343, 7
    %v345 = vsub.s32 0, %v344
    %v346 = vrot.slane %v341, %v345
    %v347 = vlaneseq
    %v348 = vshrl.u32 %v347, 7
    %v349 = vsub.s32 1, %v348
    %v350 = vrot.slane %v341, %v349
    %v385 = vunpack.c.l.b16 %v309
    %v386 = vunpack.c.h.b16 %v309
    %v387 = vunpack.c.l.b16 %v310
    %v388 = vunpack.c.h.b16 %v310
    %v389 = vunpack.c.l.b16 %v311
    %v390 = vunpack.c.h.b16 %v311
    %v391 = vunpack.c.l.b16 %v312
    %v392 = vunpack.c.h.b16 %v312
    %v393 = vunpack.c.l.b16 %v313
    %v394 = vunpack.c.h.b16 %v313
    %v395 = vunpack.c.l.b16 %v314
    %v396 = vunpack.c.h.b16 %v314
    %v397 = vunpack.c.l.b16 %v315
    %v398 = vunpack.c.h.b16 %v315
    %v399 = vunpack.c.l.b16 %v316
    %v400 = vunpack.c.h.b16 %v316
    %v401 = vunpack.c.l.b16 %v317
    %v402 = vunpack.c.h.b16 %v317
    %v403 = vunpack.c.l.b16 %v318
    %v404 = vunpack.c.h.b16 %v318
    %v405 = vunpack.c.l.b16 %v319
    %v406 = vunpack.c.h.b16 %v319
    %v407 = vunpack.c.l.b16 %v320
    %v408 = vunpack.c.h.b16 %v320
    %v409 = vunpack.c.l.b16 %v321
    %v410 = vunpack.c.h.b16 %v321
    %v411 = vunpack.c.l.b16 %v322
    %v412 = vunpack.c.h.b16 %v322
    %v413 = vunpack.c.l.b16 %v323
    %v414 = vunpack.c.h.b16 %v323
    %v415 = vunpack.c.l.b16 %v324
    %v416 = vunpack.c.h.b16 %v324
    %v417 = vunpack.c.l.b16 %v325
    %v418 = vunpack.c.h.b16 %v325
    %v419 = vunpack.c.l.b16 %v326
    %v420 = vunpack.c.h.b16 %v326
    %v421 = vunpack.c.l.b16 %v327
    %v422 = vunpack.c.h.b16 %v327
    %v423 = vunpack.c.l.b16 %v328
    %v424 = vunpack.c.h.b16 %v328
    %v425 = vunpack.c.l.b16 %v329
    %v426 = vunpack.c.h.b16 %v329
    %v427 = vunpack.c.l.b16 %v330
    %v428 = vunpack.c.h.b16 %v330
    %v429 = vunpack.c.l.b16 %v331
    %v430 = vunpack.c.h.b16 %v331
    %v431 = vunpack.c.l.b16 %v332
    %v432 = vunpack.c.h.b16 %v332
    %v433 = vunpack.c.l.b16 %v333
    %v434 = vunpack.c.h.b16 %v333
    %v435 = vunpack.c.l.b16 %v334
    %v436 = vunpack.c.h.b16 %v334
    %v437 = vunpack.c.l.b16 %v335
    %v438 = vunpack.c.h.b16 %v335
    %v439 = vunpack.c.l.b16 %v336
    %v440 = vunpack.c.h.b16 %v336
    %v441 = vunpack.c.l.b16 %v337
    %v442 = vunpack.c.h.b16 %v337
    %v443 = vunpack.c.l.b16 %v338
    %v444 = vunpack.c.h.b16 %v338
    %v445 = vunpack.c.l.b16 %v339
    %v446 = vunpack.c.h.b16 %v339
    %v447 = vunpack.c.l.b16 %v340
    %v448 = vunpack.c.h.b16 %v340
    %v449 = vpack.c.b16 %v387, %v385
    %v450 = vpack.c.b16 %v388, %v386
    %v451 = vpack.c.b16 %v391, %v389
    %v452 = vpack.c.b16 %v392, %v390
    %v453 = vpack.c.b16 %v395, %v393
    %v454 = vpack.c.b16 %v396, %v394
    %v455 = vpack.c.b16 %v399, %v397
    %v456 = vpack.c.b16 %v400, %v398
    %v457 = vpack.c.b16 %v403, %v401
    %v458 = vpack.c.b16 %v404, %v402
    %v459 = vpack.c.b16 %v407, %v405
    %v460 = vpack.c.b16 %v408, %v406
    %v461 = vpack.c.b16 %v411, %v409
    %v462 = vpack.c.b16 %v412, %v410
    %v463 = vpack.c.b16 %v415, %v413
    %v464 = vpack.c.b16 %v416, %v414
    %v465 = vpack.c.b16 %v419, %v417
    %v466 = vpack.c.b16 %v420, %v418
    %v467 = vpack.c.b16 %v423, %v421
    %v468 = vpack.c.b16 %v424, %v422
    %v469 = vpack.c.b16 %v427, %v425
    %v470 = vpack.c.b16 %v428, %v426
    %v471 = vpack.c.b16 %v431, %v429
    %v472 = vpack.c.b16 %v432, %v430
    %v473 = vpack.c.b16 %v435, %v433
    %v474 = vpack.c.b16 %v436, %v434
    %v475 = vpack.c.b16 %v439, %v437
    %v476 = vpack.c.b16 %v440, %v438
    %v477 = vpack.c.b16 %v443, %v441
    %v478 = vpack.c.b16 %v444, %v442
    %v479 = vpack.c.b16 %v447, %v445
    %v480 = vpack.c.b16 %v448, %v446
    %513 = vmatprep.subr.bf16.mxu0 %v450
    %514 = vmatpush1.bf16.msra.mxu0 %v449
    %515 = vmatprep.subr.bf16.mxu0 %v452
    %516 = vmatpush1.bf16.msra.mxu0 %v451
    %517 = vmatprep.subr.bf16.mxu0 %v454
    %518 = vmatpush1.bf16.msra.mxu0 %v453
    %519 = vmatprep.subr.bf16.mxu0 %v456
    %520 = vmatpush1.bf16.msra.mxu0 %v455
    %521 = vmatprep.subr.bf16.mxu0 %v458
    %522 = vmatpush1.bf16.msra.mxu0 %v457
    %523 = vmatprep.subr.bf16.mxu0 %v460
    %524 = vmatpush1.bf16.msra.mxu0 %v459
    %525 = vmatprep.subr.bf16.mxu0 %v462
    %526 = vmatpush1.bf16.msra.mxu0 %v461
    %527 = vmatprep.subr.bf16.mxu0 %v464
    %528 = vmatpush1.bf16.msra.mxu0 %v463
    %529 = vmatprep.subr.bf16.mxu0 %v466
    %530 = vmatpush1.bf16.msra.mxu0 %v465
    %531 = vmatprep.subr.bf16.mxu0 %v468
    %532 = vmatpush1.bf16.msra.mxu0 %v467
    %533 = vmatprep.subr.bf16.mxu0 %v470
    %534 = vmatpush1.bf16.msra.mxu0 %v469
    %535 = vmatprep.subr.bf16.mxu0 %v472
    %536 = vmatpush1.bf16.msra.mxu0 %v471
    %537 = vmatprep.subr.bf16.mxu0 %v474
    %538 = vmatpush1.bf16.msra.mxu0 %v473
    %539 = vmatprep.subr.bf16.mxu0 %v476
    %540 = vmatpush1.bf16.msra.mxu0 %v475
    %541 = vmatprep.subr.bf16.mxu0 %v478
    %542 = vmatpush1.bf16.msra.mxu0 %v477
    %543 = vmatprep.subr.bf16.mxu0 %v480
    %544 = vmatpush1.bf16.msra.mxu0 %v479
    %545 = vmatprep.mubr.bf16.mxu0 %v294
    %546 = vmatmul.mubr.bf16.gmra.mrb[0].mxu0 %v293
    %v547 = vpop.f32.mrb[0].mxu0
    %v548 = vadd.f32 %v346, %v547
    %v549 = vpop.f32.mrb[0].mxu0
    %v550 = vadd.f32 %v350, %v549
    %v551 = vpop.f32.mrb[0].mxu0
    %v552 = vadd.f32 %v346, %v551
    %v553 = vpop.f32.mrb[0].mxu0
    %v554 = vadd.f32 %v350, %v553
    %555 = vmatprep.mubr.bf16.mxu0 %v296
    %556 = vmatmul.mubr.bf16.gmra.mrb[0].mxu0 %v295
    %v557 = vpop.f32.mrb[0].mxu0
    %v558 = vadd.f32 %v346, %v557
    %v559 = vpop.f32.mrb[0].mxu0
    %v560 = vadd.f32 %v350, %v559
    %v561 = vpop.f32.mrb[0].mxu0
    %v562 = vadd.f32 %v346, %v561
    %v563 = vpop.f32.mrb[0].mxu0
    %v564 = vadd.f32 %v350, %v563
    %565 = vmatprep.mubr.bf16.mxu0 %v298
    %566 = vmatmul.mubr.bf16.gmra.mrb[0].mxu0 %v297
    %v567 = vpop.f32.mrb[0].mxu0
    %v568 = vadd.f32 %v346, %v567
    %v569 = vpop.f32.mrb[0].mxu0
    %v570 = vadd.f32 %v350, %v569
    %v571 = vpop.f32.mrb[0].mxu0
    %v572 = vadd.f32 %v346, %v571
    %v573 = vpop.f32.mrb[0].mxu0
    %v574 = vadd.f32 %v350, %v573
    %575 = vmatprep.mubr.bf16.mxu0 %v300
    %576 = vmatmul.mubr.bf16.gmra.mrb[0].mxu0 %v299
    %v577 = vpop.f32.mrb[0].mxu0
    %v578 = vadd.f32 %v346, %v577
    %v579 = vpop.f32.mrb[0].mxu0
    %v580 = vadd.f32 %v350, %v579
    %v581 = vpop.f32.mrb[0].mxu0
    %v582 = vadd.f32 %v346, %v581
    %v583 = vpop.f32.mrb[0].mxu0
    %v584 = vadd.f32 %v350, %v583
    %585 = vmatprep.mubr.bf16.mxu0 %v302
    %586 = vmatmul.mubr.bf16.gmra.mrb[0].mxu0 %v301
    %v587 = vpop.f32.mrb[0].mxu0
    %v588 = vadd.f32 %v346, %v587
    %v589 = vpop.f32.mrb[0].mxu0
    %v590 = vadd.f32 %v350, %v589
    %v591 = vpop.f32.mrb[0].mxu0
    %v592 = vadd.f32 %v346, %v591
    %v593 = vpop.f32.mrb[0].mxu0
    %v594 = vadd.f32 %v350, %v593
    %595 = vmatprep.mubr.bf16.mxu0 %v304
    %596 = vmatmul.mubr.bf16.gmra.mrb[0].mxu0 %v303
    %v597 = vpop.f32.mrb[0].mxu0
    %v598 = vadd.f32 %v346, %v597
    %v599 = vpop.f32.mrb[0].mxu0
    %v600 = vadd.f32 %v350, %v599
    %v601 = vpop.f32.mrb[0].mxu0
    %v602 = vadd.f32 %v346, %v601
    %v603 = vpop.f32.mrb[0].mxu0
    %v604 = vadd.f32 %v350, %v603
    %605 = vmatprep.mubr.bf16.mxu0 %v306
    %606 = vmatmul.mubr.bf16.gmra.mrb[0].mxu0 %v305
    %v607 = vpop.f32.mrb[0].mxu0
    %v608 = vadd.f32 %v346, %v607
    %v609 = vpop.f32.mrb[0].mxu0
    %v610 = vadd.f32 %v350, %v609
    %v611 = vpop.f32.mrb[0].mxu0
    %v612 = vadd.f32 %v346, %v611
    %v613 = vpop.f32.mrb[0].mxu0
    %v614 = vadd.f32 %v350, %v613
    %615 = vmatprep.mubr.bf16.mxu0 %v308
    %616 = vmatmul.mubr.bf16.gmra.mrb[0].mxu0 %v307
    %v617 = vpop.f32.mrb[0].mxu0
    %v618 = vadd.f32 %v346, %v617
    %v619 = vpop.f32.mrb[0].mxu0
    %v620 = vadd.f32 %v350, %v619
    %v621 = vpop.f32.mrb[0].mxu0
    %v622 = vadd.f32 %v346, %v621
    %v623 = vpop.f32.mrb[0].mxu0
    %v624 = vadd.f32 %v350, %v623
    %625 = vdwg.mxu0
    %v626 = vmax.f32 %v548, 0.0
    %v627 = vmax.f32 %v550, 0.0
    %v628 = vmax.f32 %v552, 0.0
    %v629 = vmax.f32 %v554, 0.0
    %v630 = vmax.f32 %v558, 0.0
    %v631 = vmax.f32 %v560, 0.0
    %v632 = vmax.f32 %v562, 0.0
    %v633 = vmax.f32 %v564, 0.0
    %v634 = vmax.f32 %v568, 0.0
    %v635 = vmax.f32 %v570, 0.0
    %v636 = vmax.f32 %v572, 0.0
    %v637 = vmax.f32 %v574, 0.0
    %v638 = vmax.f32 %v578, 0.0
    %v639 = vmax.f32 %v580, 0.0
    %v640 = vmax.f32 %v582, 0.0
    %v641 = vmax.f32 %v584, 0.0
    %v642 = vmax.f32 %v588, 0.0
    %v643 = vmax.f32 %v590, 0.0
    %v644 = vmax.f32 %v592, 0.0
    %v645 = vmax.f32 %v594, 0.0
    %v646 = vmax.f32 %v598, 0.0
    %v647 = vmax.f32 %v600, 0.0
    %v648 = vmax.f32 %v602, 0.0
    %v649 = vmax.f32 %v604, 0.0
    %v650 = vmax.f32 %v608, 0.0
    %v651 = vmax.f32 %v610, 0.0
    %v652 = vmax.f32 %v612, 0.0
    %v653 = vmax.f32 %v614, 0.0
    %v654 = vmax.f32 %v618, 0.0
    %v655 = vmax.f32 %v620, 0.0
    %v656 = vmax.f32 %v622, 0.0
    %v657 = vmax.f32 %v624, 0.0
    %v658 = vld [vmem:[%s5] sm:$0x3]
    %v659 = vunpack.c.l.bf16 %v658
    %v661 = vlaneseq
    %v662 = vshrl.u32 %v661, 7
    %v663 = vsub.s32 0, %v662
    %v664 = vrot.slane %v659, %v663
    %v665 = vlaneseq
    %v666 = vshrl.u32 %v665, 7
    %v667 = vsub.s32 2, %v666
    %v668 = vrot.slane %v659, %v667
    %v671 = vlaneseq
    %v672 = vshrl.u32 %v671, 7
    %v673 = vsub.s32 0, %v672
    %v674 = vrot.slane %v664, %v673
    %v675 = vlaneseq
    %v676 = vshrl.u32 %v675, 7
    %v677 = vsub.s32 0, %v676
    %v678 = vrot.slane %v668, %v677
    %v679 = vmul.f32 %v626, %v674
    %v680 = vmul.f32 %v627, %v678
    %v681 = vmul.f32 %v628, %v674
    %v682 = vmul.f32 %v629, %v678
    %v683 = vmul.f32 %v630, %v674
    %v684 = vmul.f32 %v631, %v678
    %v685 = vmul.f32 %v632, %v674
    %v686 = vmul.f32 %v633, %v678
    %v687 = vmul.f32 %v634, %v674
    %v688 = vmul.f32 %v635, %v678
    %v689 = vmul.f32 %v636, %v674
    %v690 = vmul.f32 %v637, %v678
    %v691 = vmul.f32 %v638, %v674
    %v692 = vmul.f32 %v639, %v678
    %v693 = vmul.f32 %v640, %v674
    %v694 = vmul.f32 %v641, %v678
    %v695 = vmul.f32 %v642, %v674
    %v696 = vmul.f32 %v643, %v678
    %v697 = vmul.f32 %v644, %v674
    %v698 = vmul.f32 %v645, %v678
    %v699 = vmul.f32 %v646, %v674
    %v700 = vmul.f32 %v647, %v678
    %v701 = vmul.f32 %v648, %v674
    %v702 = vmul.f32 %v649, %v678
    %v703 = vmul.f32 %v650, %v674
    %v704 = vmul.f32 %v651, %v678
    %v705 = vmul.f32 %v652, %v674
    %v706 = vmul.f32 %v653, %v678
    %v707 = vmul.f32 %v654, %v674
    %v708 = vmul.f32 %v655, %v678
    %v709 = vmul.f32 %v656, %v674
    %v710 = vmul.f32 %v657, %v678
    %v711 = vadd.f32 %v679, %v680
    %712 = vadd.xlane.f32.xlu0 %v711
    %v713 = vpop.xlane.xlu0 %712
    %v714 = vadd.f32 %v681, %v682
    %715 = vadd.xlane.f32.xlu0 %v714
    %v716 = vpop.xlane.xlu0 %715
    %v717 = vadd.f32 %v683, %v684
    %718 = vadd.xlane.f32.xlu0 %v717
    %v719 = vpop.xlane.xlu0 %718
    %v720 = vadd.f32 %v685, %v686
    %721 = vadd.xlane.f32.xlu0 %v720
    %v722 = vpop.xlane.xlu0 %721
    %v723 = vadd.f32 %v687, %v688
    %724 = vadd.xlane.f32.xlu0 %v723
    %v725 = vpop.xlane.xlu0 %724
    %v726 = vadd.f32 %v689, %v690
    %727 = vadd.xlane.f32.xlu0 %v726
    %v728 = vpop.xlane.xlu0 %727
    %v729 = vadd.f32 %v691, %v692
    %730 = vadd.xlane.f32.xlu0 %v729
    %v731 = vpop.xlane.xlu0 %730
    %v732 = vadd.f32 %v693, %v694
    %733 = vadd.xlane.f32.xlu0 %v732
    %v734 = vpop.xlane.xlu0 %733
    %v735 = vadd.f32 %v695, %v696
    %736 = vadd.xlane.f32.xlu0 %v735
    %v737 = vpop.xlane.xlu0 %736
    %v738 = vadd.f32 %v697, %v698
    %739 = vadd.xlane.f32.xlu0 %v738
    %v740 = vpop.xlane.xlu0 %739
    %v741 = vadd.f32 %v699, %v700
    %742 = vadd.xlane.f32.xlu0 %v741
    %v743 = vpop.xlane.xlu0 %742
    %v744 = vadd.f32 %v701, %v702
    %745 = vadd.xlane.f32.xlu0 %v744
    %v746 = vpop.xlane.xlu0 %745
    %v747 = vadd.f32 %v703, %v704
    %748 = vadd.xlane.f32.xlu0 %v747
    %v749 = vpop.xlane.xlu0 %748
    %v750 = vadd.f32 %v705, %v706
    %751 = vadd.xlane.f32.xlu0 %v750
    %v752 = vpop.xlane.xlu0 %751
    %v753 = vadd.f32 %v707, %v708
    %754 = vadd.xlane.f32.xlu0 %v753
    %v755 = vpop.xlane.xlu0 %754
    %v756 = vadd.f32 %v709, %v710
    %757 = vadd.xlane.f32.xlu0 %v756
    %v758 = vpop.xlane.xlu0 %757
    %s759 = sld [smem:[#allocation2]]
    %v760 = vstv %s759
    %v761 = vadd.f32 %v713, %v760
    %v762 = vadd.f32 %v716, %v760
    %v763 = vadd.f32 %v719, %v760
    %v764 = vadd.f32 %v722, %v760
    %v765 = vadd.f32 %v725, %v760
    %v766 = vadd.f32 %v728, %v760
    %v767 = vadd.f32 %v731, %v760
    %v768 = vadd.f32 %v734, %v760
    %v769 = vadd.f32 %v737, %v760
    %v770 = vadd.f32 %v740, %v760
    %v771 = vadd.f32 %v743, %v760
    %v772 = vadd.f32 %v746, %v760
    %v773 = vadd.f32 %v749, %v760
    %v774 = vadd.f32 %v752, %v760
    %v775 = vadd.f32 %v755, %v760
    %v776 = vadd.f32 %v758, %v760
    %v793 = vlaneseq
    %v794 = vand.u32 %v793, 127
    %v795 = vlaneseq
    %v796 = vshrl.u32 %v795, 7
    %v797 = vsub.s32 %v794, %v796
    %v798 = vrot.slane %v761, %v797
    %v799 = vadd.s32 %v794, 4294967288
    %v800 = vlaneseq
    %v801 = vshrl.u32 %v800, 7
    %v802 = vsub.s32 %v799, %v801
    %v803 = vrot.slane %v762, %v802
    %vm804 = vcmask 130112
    %v805 = vsel %vm804, %v803, %v798
    %v806 = vadd.s32 %v794, 4294967280
    %v807 = vlaneseq
    %v808 = vshrl.u32 %v807, 7
    %v809 = vsub.s32 %v806, %v808
    %v810 = vrot.slane %v763, %v809
    %vm811 = vcmask 195712
    %v812 = vsel %vm811, %v810, %v805
    %v813 = vadd.s32 %v794, 4294967272
    %v814 = vlaneseq
    %v815 = vshrl.u32 %v814, 7
    %v816 = vsub.s32 %v813, %v815
    %v817 = vrot.slane %v764, %v816
    %vm818 = vcmask 261312
    %v819 = vsel %vm818, %v817, %v812
    %v820 = vadd.s32 %v794, 4294967264
    %v821 = vlaneseq
    %v822 = vshrl.u32 %v821, 7
    %v823 = vsub.s32 %v820, %v822
    %v824 = vrot.slane %v765, %v823
    %vm825 = vcmask 326912
    %v826 = vsel %vm825, %v824, %v819
    %v827 = vadd.s32 %v794, 4294967256
    %v828 = vlaneseq
    %v829 = vshrl.u32 %v828, 7
    %v830 = vsub.s32 %v827, %v829
    %v831 = vrot.slane %v766, %v830
    %vm832 = vcmask 392512
    %v833 = vsel %vm832, %v831, %v826
    %v834 = vadd.s32 %v794, 4294967248
    %v835 = vlaneseq
    %v836 = vshrl.u32 %v835, 7
    %v837 = vsub.s32 %v834, %v836
    %v838 = vrot.slane %v767, %v837
    %vm839 = vcmask 458112
    %v840 = vsel %vm839, %v838, %v833
    %v841 = vadd.s32 %v794, 4294967240
    %v842 = vlaneseq
    %v843 = vshrl.u32 %v842, 7
    %v844 = vsub.s32 %v841, %v843
    %v845 = vrot.slane %v768, %v844
    %vm846 = vcmask 523712
    %v847 = vsel %vm846, %v845, %v840
    %v848 = vadd.s32 %v794, 4294967232
    %v849 = vlaneseq
    %v850 = vshrl.u32 %v849, 7
    %v851 = vsub.s32 %v848, %v850
    %v852 = vrot.slane %v769, %v851
    %vm853 = vcmask 589312
    %v854 = vsel %vm853, %v852, %v847
    %v855 = vadd.s32 %v794, 4294967224
    %v856 = vlaneseq
    %v857 = vshrl.u32 %v856, 7
    %v858 = vsub.s32 %v855, %v857
    %v859 = vrot.slane %v770, %v858
    %vm860 = vcmask 654912
    %v861 = vsel %vm860, %v859, %v854
    %v862 = vadd.s32 %v794, 4294967216
    %v863 = vlaneseq
    %v864 = vshrl.u32 %v863, 7
    %v865 = vsub.s32 %v862, %v864
    %v866 = vrot.slane %v771, %v865
    %vm867 = vcmask 720512
    %v868 = vsel %vm867, %v866, %v861
    %v869 = vadd.s32 %v794, 4294967208
    %v870 = vlaneseq
    %v871 = vshrl.u32 %v870, 7
    %v872 = vsub.s32 %v869, %v871
    %v873 = vrot.slane %v772, %v872
    %vm874 = vcmask 786112
    %v875 = vsel %vm874, %v873, %v868
    %v876 = vadd.s32 %v794, 4294967200
    %v877 = vlaneseq
    %v878 = vshrl.u32 %v877, 7
    %v879 = vsub.s32 %v876, %v878
    %v880 = vrot.slane %v773, %v879
    %vm881 = vcmask 851712
    %v882 = vsel %vm881, %v880, %v875
    %v883 = vadd.s32 %v794, 4294967192
    %v884 = vlaneseq
    %v885 = vshrl.u32 %v884, 7
    %v886 = vsub.s32 %v883, %v885
    %v887 = vrot.slane %v774, %v886
    %vm888 = vcmask 917312
    %v889 = vsel %vm888, %v887, %v882
    %v890 = vadd.s32 %v794, 4294967184
    %v891 = vlaneseq
    %v892 = vshrl.u32 %v891, 7
    %v893 = vsub.s32 %v890, %v892
    %v894 = vrot.slane %v775, %v893
    %vm895 = vcmask 982912
    %v896 = vsel %vm895, %v894, %v889
    %v897 = vadd.s32 %v794, 4294967176
    %v898 = vlaneseq
    %v899 = vshrl.u32 %v898, 7
    %v900 = vsub.s32 %v897, %v899
    %v901 = vrot.slane %v776, %v900
    %vm902 = vcmask 1048512
    %v903 = vsel %vm902, %v901, %v896
    %905 = vst [vmem:[%s7] sm:$0x1] %v903
    // Predicated region
    $region34: #{q_net_forward.1} parent=1 // pred_check
      _
    $region35: #{q_net_forward.1} parent=1 // pred_check_branch
      %907 = sbr.rel (0) target = $region37
    $region36: #{q_net_forward.1} parent=1 // pred_region
      _
    $region37: #{q_net_forward.1} parent=1 // pred_fallthru
      _
    // Predicated region
    $region38: #{q_net_forward.1} parent=1 // pred_check
      _
    $region39: #{q_net_forward.1} parent=1 // pred_check_branch
      %909 = sbr.rel (0) target = $region41
    $region40: #{q_net_forward.1} parent=1 // pred_region
      _
    $region41: #{q_net_forward.1} parent=1 // pred_fallthru
      _
    %910 = vsyncpa [#allocation4], 1

</llo_original>
